<compile_context>
chip_gen: v7x
topology: tpu7x:2x2x1
jax: 0.10.0
libtpu: 0.0.40
codegen_flags: <defaults>
</compile_context>

<pallas_src>
import jax
import jax.numpy as jnp
from jax import lax
from jax.experimental import pallas as pl
from jax.experimental.pallas import tpu as pltpu

NEG_SLOPE = 0.2      # PyG GATConv default negative_slope
MASK_SCALE = 1e30    # additive bias magnitude for non-edges


def _proj_kernel(x_ref, w_ref, asrc_ref, adst_ref, hf_ref, ssrc_ref, sdst_ref):
    """Per-layer projection + attention row/column precompute (un-gridded).

    x_ref    : [N, D]      f32  node features (input to this layer)
    w_ref    : [H, D, D]   bf16 per-head projections
    asrc_ref : [H, 1, D]   f32  per-head source attention vector
    adst_ref : [H, 1, D]   f32  per-head target attention vector
    hf_ref   : [H*N, D]    bf16 sublane-stacked projected features (head-major)
    ssrc_ref : [H, 1, N]   f32  s_src[h, 0, j] = <a_src_h, hf_h[j]>
    sdst_ref : [H, N, 1]   f32  s_dst[h, i, 0] = <a_dst_h, hf_h[i]>
    """
    heads = w_ref.shape[0]
    n, _ = x_ref.shape
    x_bf = x_ref[...].astype(jnp.bfloat16)
    for h in range(heads):                                    # heads is small & static
        hf = jnp.dot(x_bf, w_ref[h], preferred_element_type=jnp.float32)   # [N, D] f32
        hf_ref[h * n:(h + 1) * n, :] = hf.astype(jnp.bfloat16)
        # s_dst: VPU broadcast-mul + lane reduce -> [N, 1]
        sdst_ref[h] = jnp.sum(hf * adst_ref[h], axis=-1, keepdims=True)
        # s_src: [1, D] . [N, D]^T contraction -> [1, N] (computed once per layer,
        # reused by every i-tile of the attention kernel)
        ssrc_ref[h] = lax.dot_general(asrc_ref[h], hf, (((1,), (1,)), ((), ())),
                                      preferred_element_type=jnp.float32)


def _attn_kernel(bias_ref, hf_ref, ssrc_ref, sdst_ref, out_ref, attn_ref):
    """One target-node tile of GAT attention + aggregation.

    bias_ref : [TILE_I, N]       f32  additive mask (0 on edges, -1e30 off-edge)
    hf_ref   : [H*N, D]          bf16 sublane-stacked projected features (all nodes)
    ssrc_ref : [H, 1, N]         f32
    sdst_ref : [H, TILE_I, 1]    f32
    out_ref  : [TILE_I, D]       f32  layer output tile (mean over heads)
    attn_ref : [H, TILE_I, N]    bf16 dense attention weights tile
    """
    heads = attn_ref.shape[0]
    bias = bias_ref[...]

    attn_heads = []
    for h in range(heads):
        z = sdst_ref[h] + ssrc_ref[h]                       # [TILE_I, N]
        z = jnp.maximum(z, NEG_SLOPE * z)                   # LeakyReLU(0.2), 2 VALU ops
        e = z + bias                                        # mask via additive bias
        # softmax over incoming edges j of each target node i (row-independent)
        m = jnp.max(e, axis=-1, keepdims=True)
        p = jnp.exp(e - m)                                  # underflows to 0 off-edge
        denom = jnp.sum(p, axis=-1, keepdims=True)
        attn = (p * pl.reciprocal(denom, approx=True)).astype(jnp.bfloat16)
        attn_ref[h] = attn                                  # bf16 writeback (halved DMA)
        attn_heads.append(attn)

    # Fused aggregation: one MXU matmul over the head-concatenated contraction.
    attn_cat = attn_heads[0] if heads == 1 else jnp.concatenate(attn_heads, axis=-1)
    acc = jnp.dot(attn_cat, hf_ref[...], preferred_element_type=jnp.float32)
    out_ref[...] = (acc * jnp.float32(1.0 / heads)).astype(out_ref.dtype)  # concat=False


def _mean_kernel(*refs):
    """out = mean over the (L+1) stacked feature tensors (one i-tile)."""
    out_ref = refs[-1]
    feats = refs[:-1]
    acc = feats[0][...].astype(jnp.float32)
    for r in feats[1:]:
        acc = acc + r[...].astype(jnp.float32)
    out_ref[...] = (acc * jnp.float32(1.0 / len(feats))).astype(out_ref.dtype)


def _pick_tile_i(n):
    """Largest row-tile (multiple of 8) that divides n and gives >= 2 tiles."""
    for t in (256, 128, 64, 32, 16, 8):
        if t < n and n % t == 0:
            return t
    return n


def amatrix_forward(x, edge_index, params):
    """Amatrix.forward.  params = [(w [H,D,D], a_src [H,1,D], a_dst [H,1,D]), ...]."""
    n, d = x.shape
    n_layer = len(params)
    heads = params[0][0].shape[0]
    tile_i = _pick_tile_i(n)
    grid_i = n // tile_i

    # Dense additive mask bias, built ONCE and reused for every layer (plain-JAX glue):
    # bias[i, j] = 0 iff edge j -> i (self loops included), else -1e30.
    # TODO(synk): duplicate edges in edge_index are deduplicated here, unlike PyG's
    # per-edge softmax; attention is returned dense [H, N, N] (bf16) instead of
    # (edge_index, alpha).
    src, dst = edge_index[0], edge_index[1]
    adj = jnp.zeros((n, n), jnp.float32).at[dst, src].max(1.0)
    adj = jnp.maximum(adj, jnp.eye(n, dtype=jnp.float32))         # add_self_loops=True
    bias = (adj - 1.0) * jnp.float32(MASK_SCALE)

    vmem = pl.BlockSpec(memory_space=pltpu.MemorySpace.VMEM)

    feats = [x]
    attns = []
    x_cur = x
    for (w, a_src, a_dst) in params:
        # --- per-layer projection + s_src / s_dst precompute (un-gridded) ---
        hf, ssrc, sdst = pl.pallas_call(
            _proj_kernel,
            out_shape=(
                jax.ShapeDtypeStruct((heads * n, d), jnp.bfloat16),
                jax.ShapeDtypeStruct((heads, 1, n), jnp.float32),
                jax.ShapeDtypeStruct((heads, n, 1), jnp.float32),
            ),
            in_specs=[vmem] * 4,
            out_specs=(vmem, vmem, vmem),
        )(x_cur, w.astype(jnp.bfloat16), a_src, a_dst)

        # --- attention / softmax / aggregation, gridded over target-node tiles ---
        x_cur, attn = pl.pallas_call(
            _attn_kernel,
            grid=(grid_i,),
            out_shape=(
                jax.ShapeDtypeStruct((n, d), jnp.float32),
                jax.ShapeDtypeStruct((heads, n, n), jnp.bfloat16),
            ),
            in_specs=[
                pl.BlockSpec((tile_i, n), lambda i: (i, 0)),          # bias tile
                pl.BlockSpec((heads * n, d), lambda i: (0, 0)),       # full hf (sources)
                pl.BlockSpec((heads, 1, n), lambda i: (0, 0, 0)),     # s_src rows
                pl.BlockSpec((heads, tile_i, 1), lambda i: (0, i, 0)),  # s_dst tile
            ],
            out_specs=(
                pl.BlockSpec((tile_i, d), lambda i: (i, 0)),
                pl.BlockSpec((heads, tile_i, n), lambda i: (0, i, 0)),
            ),
            compiler_params=pltpu.CompilerParams(
                dimension_semantics=("parallel",),       # i-tiles independent -> megacore
                # Tiled working set is small; 64 MiB fits every generation
                # (<= v7x physical 64 MiB, well under v5e/v6e 128 MiB).
                vmem_limit_bytes=64 << 20,
            ),
        )(bias, hf, ssrc, sdst)

        feats.append(x_cur)
        attns.append(attn)

    # torch.mean(torch.stack([x] + layer_outputs, dim=1), dim=1)
    out = pl.pallas_call(
        _mean_kernel,
        grid=(grid_i,),
        out_shape=jax.ShapeDtypeStruct((n, d), jnp.float32),
        in_specs=[pl.BlockSpec((tile_i, d), lambda i: (i, 0))] * len(feats),
        out_specs=pl.BlockSpec((tile_i, d), lambda i: (i, 0)),
        compiler_params=pltpu.CompilerParams(dimension_semantics=("parallel",)),
    )(*feats)

    return out, attns


def init_params(key, in_dim, out_dim, heads, n_layer):
    """Deterministic synthetic parameters (shapes from AsymMatrix __init__ semantics).

    torch.stack([x] + layer outputs) in Amatrix.forward requires in_dim == out_dim.
    TODO(synk): PyG GATConv's bias term is omitted (bias not part of the provided spec).
    """
    assert in_dim == out_dim, "Amatrix stack/mean requires in_dim == out_dim"
    params = []
    d_in = in_dim
    for _ in range(n_layer):
        key, k1, k2, k3 = jax.random.split(key, 4)
        w = 0.1 * jax.random.normal(k1, (heads, d_in, out_dim), jnp.float32)
        a_src = 0.1 * jax.random.normal(k2, (heads, 1, out_dim), jnp.float32)
        a_dst = 0.1 * jax.random.normal(k3, (heads, 1, out_dim), jnp.float32)
        params.append((w, a_src, a_dst))
        d_in = out_dim                         # concat=False -> out_dim feeds next layer
    return params


if __name__ == "__main__":
    # Small graph consistent with the module: in_dim == out_dim so the stack of
    # [x] + layer outputs is well-defined.  N=16 with TILE_I=8 exercises the grid.
    N, D, HEADS, N_LAYER, E = 16, 32, 2, 2, 40

    key = jax.random.PRNGKey(0)
    kx, ke, kp = jax.random.split(key, 3)

    x = jax.random.normal(kx, (N, D), jnp.float32)
    edge_index = jax.random.randint(ke, (2, E), 0, N, dtype=jnp.int32)
    params = init_params(kp, D, D, HEADS, N_LAYER)

    out, attns = amatrix_forward(x, edge_index, params)
    jax.block_until_ready(out)
    for a in attns:
        jax.block_until_ready(a)

    assert out.shape == (N, D)
    assert len(attns) == N_LAYER and attns[0].shape == (HEADS, N, N)
    print("KERNEL_OK")
</pallas_src>

<mosaic_0001>
module attributes {stable_mosaic.version = 11 : i64} {
  func.func @_proj_kernel(%arg0: memref<16x32xf32, #tpu.memory_space<vmem>>, %arg1: memref<2x32x32xbf16, #tpu.memory_space<vmem>>, %arg2: memref<2x1x32xf32, #tpu.memory_space<vmem>>, %arg3: memref<2x1x32xf32, #tpu.memory_space<vmem>>, %arg4: memref<32x32xbf16, #tpu.memory_space<vmem>>, %arg5: memref<2x1x16xf32, #tpu.memory_space<vmem>>, %arg6: memref<2x16x1xf32, #tpu.memory_space<vmem>>) attributes {dimension_semantics = [], scalar_prefetch = 0 : i64, scratch_operands = 0 : i64, tpu.core_type = #tpu.core_type<tc>} {
    %c0 = arith.constant 0 : index
    %c0_0 = arith.constant 0 : index
    %0 = vector.load %arg0[%c0, %c0_0] : memref<16x32xf32, #tpu.memory_space<vmem>>, vector<16x32xf32>
    %1 = arith.truncf %0 : vector<16x32xf32> to vector<16x32xbf16>
    %c0_1 = arith.constant 0 : index
    %c0_2 = arith.constant 0 : index
    %c0_3 = arith.constant 0 : index
    %2 = vector.load %arg1[%c0_1, %c0_2, %c0_3] : memref<2x32x32xbf16, #tpu.memory_space<vmem>>, vector<1x32x32xbf16>
    %3 = vector.shape_cast %2 : vector<1x32x32xbf16> to vector<32x32xbf16>
    %cst = arith.constant dense<0.000000e+00> : vector<16x32xf32>
    %4 = tpu.matmul %1, %3, %cst {dimension_numbers = #tpu.dot_dimension_numbers<[1], [0], [0], [1], [0, 0, 1, 1], [], []>} : vector<16x32xbf16>, vector<32x32xbf16>, vector<16x32xf32> -> vector<16x32xf32>
    %5 = arith.truncf %4 : vector<16x32xf32> to vector<16x32xbf16>
    %c0_4 = arith.constant 0 : index
    %c0_5 = arith.constant 0 : index
    %6 = vector.load %arg4[%c0_4, %c0_5] : memref<32x32xbf16, #tpu.memory_space<vmem>>, vector<16x32xbf16>
    tpu.vector_store %arg4[%c0_4, %c0_5], %5 {strides = array<i32>} : memref<32x32xbf16, #tpu.memory_space<vmem>>, vector<16x32xbf16>,
    %c0_6 = arith.constant 0 : index
    %c0_7 = arith.constant 0 : index
    %c0_8 = arith.constant 0 : index
    %7 = vector.load %arg3[%c0_6, %c0_7, %c0_8] : memref<2x1x32xf32, #tpu.memory_space<vmem>>, vector<1x1x32xf32>
    %8 = vector.shape_cast %7 : vector<1x1x32xf32> to vector<1x32xf32>
    %9 = vector.broadcast %8 : vector<1x32xf32> to vector<16x32xf32>
    %10 = arith.mulf %4, %9 : vector<16x32xf32>
    %cst_9 = arith.constant dense<0.000000e+00> : vector<16xf32>
    %11 = vector.multi_reduction <add>, %10, %cst_9 [1] : vector<16x32xf32> to vector<16xf32>
    %12 = vector.shape_cast %11 : vector<16xf32> to vector<16x1xf32>
    %c0_10 = arith.constant 0 : index
    %c0_11 = arith.constant 0 : index
    %c0_12 = arith.constant 0 : index
    %13 = vector.load %arg6[%c0_10, %c0_11, %c0_12] : memref<2x16x1xf32, #tpu.memory_space<vmem>>, vector<1x16x1xf32>
    %14 = vector.shape_cast %13 : vector<1x16x1xf32> to vector<16x1xf32>
    %15 = vector.shape_cast %12 : vector<16x1xf32> to vector<1x16x1xf32>
    tpu.vector_store %arg6[%c0_10, %c0_11, %c0_12], %15 {strides = array<i32>} : memref<2x16x1xf32, #tpu.memory_space<vmem>>, vector<1x16x1xf32>,
    %c0_13 = arith.constant 0 : index
    %c0_14 = arith.constant 0 : index
    %c0_15 = arith.constant 0 : index
    %16 = vector.load %arg2[%c0_13, %c0_14, %c0_15] : memref<2x1x32xf32, #tpu.memory_space<vmem>>, vector<1x1x32xf32>
    %17 = vector.shape_cast %16 : vector<1x1x32xf32> to vector<1x32xf32>
    %cst_16 = arith.constant dense<0.000000e+00> : vector<1x16xf32>
    %18 = tpu.matmul %17, %4, %cst_16 {dimension_numbers = #tpu.dot_dimension_numbers<[1], [1], [0], [0], [0, 0, 1, 0], [], []>} : vector<1x32xf32>, vector<16x32xf32>, vector<1x16xf32> -> vector<1x16xf32>
    %c0_17 = arith.constant 0 : index
    %c0_18 = arith.constant 0 : index
    %c0_19 = arith.constant 0 : index
    %19 = vector.load %arg5[%c0_17, %c0_18, %c0_19] : memref<2x1x16xf32, #tpu.memory_space<vmem>>, vector<1x1x16xf32>
    %20 = vector.shape_cast %19 : vector<1x1x16xf32> to vector<1x16xf32>
    %21 = vector.shape_cast %18 : vector<1x16xf32> to vector<1x1x16xf32>
    tpu.vector_store %arg5[%c0_17, %c0_18, %c0_19], %21 {strides = array<i32>} : memref<2x1x16xf32, #tpu.memory_space<vmem>>, vector<1x1x16xf32>,
    %c1 = arith.constant 1 : index
    %c0_20 = arith.constant 0 : index
    %c0_21 = arith.constant 0 : index
    %22 = vector.load %arg1[%c1, %c0_20, %c0_21] : memref<2x32x32xbf16, #tpu.memory_space<vmem>>, vector<1x32x32xbf16>
    %23 = vector.shape_cast %22 : vector<1x32x32xbf16> to vector<32x32xbf16>
    %cst_22 = arith.constant dense<0.000000e+00> : vector<16x32xf32>
    %24 = tpu.matmul %1, %23, %cst_22 {dimension_numbers = #tpu.dot_dimension_numbers<[1], [0], [0], [1], [0, 0, 1, 1], [], []>} : vector<16x32xbf16>, vector<32x32xbf16>, vector<16x32xf32> -> vector<16x32xf32>
    %25 = arith.truncf %24 : vector<16x32xf32> to vector<16x32xbf16>
    %c16 = arith.constant 16 : index
    %c0_23 = arith.constant 0 : index
    %26 = vector.load %arg4[%c16, %c0_23] : memref<32x32xbf16, #tpu.memory_space<vmem>>, vector<16x32xbf16>
    tpu.vector_store %arg4[%c16, %c0_23], %25 {strides = array<i32>} : memref<32x32xbf16, #tpu.memory_space<vmem>>, vector<16x32xbf16>,
    %c1_24 = arith.constant 1 : index
    %c0_25 = arith.constant 0 : index
    %c0_26 = arith.constant 0 : index
    %27 = vector.load %arg3[%c1_24, %c0_25, %c0_26] : memref<2x1x32xf32, #tpu.memory_space<vmem>>, vector<1x1x32xf32>
    %28 = vector.shape_cast %27 : vector<1x1x32xf32> to vector<1x32xf32>
    %29 = vector.broadcast %28 : vector<1x32xf32> to vector<16x32xf32>
    %30 = arith.mulf %24, %29 : vector<16x32xf32>
    %cst_27 = arith.constant dense<0.000000e+00> : vector<16xf32>
    %31 = vector.multi_reduction <add>, %30, %cst_27 [1] : vector<16x32xf32> to vector<16xf32>
    %32 = vector.shape_cast %31 : vector<16xf32> to vector<16x1xf32>
    %c1_28 = arith.constant 1 : index
    %c0_29 = arith.constant 0 : index
    %c0_30 = arith.constant 0 : index
    %33 = vector.load %arg6[%c1_28, %c0_29, %c0_30] : memref<2x16x1xf32, #tpu.memory_space<vmem>>, vector<1x16x1xf32>
    %34 = vector.shape_cast %33 : vector<1x16x1xf32> to vector<16x1xf32>
    %35 = vector.shape_cast %32 : vector<16x1xf32> to vector<1x16x1xf32>
    tpu.vector_store %arg6[%c1_28, %c0_29, %c0_30], %35 {strides = array<i32>} : memref<2x16x1xf32, #tpu.memory_space<vmem>>, vector<1x16x1xf32>,
    %c1_31 = arith.constant 1 : index
    %c0_32 = arith.constant 0 : index
    %c0_33 = arith.constant 0 : index
    %36 = vector.load %arg2[%c1_31, %c0_32, %c0_33] : memref<2x1x32xf32, #tpu.memory_space<vmem>>, vector<1x1x32xf32>
    %37 = vector.shape_cast %36 : vector<1x1x32xf32> to vector<1x32xf32>
    %cst_34 = arith.constant dense<0.000000e+00> : vector<1x16xf32>
    %38 = tpu.matmul %37, %24, %cst_34 {dimension_numbers = #tpu.dot_dimension_numbers<[1], [1], [0], [0], [0, 0, 1, 0], [], []>} : vector<1x32xf32>, vector<16x32xf32>, vector<1x16xf32> -> vector<1x16xf32>
    %c1_35 = arith.constant 1 : index
    %c0_36 = arith.constant 0 : index
    %c0_37 = arith.constant 0 : index
    %39 = vector.load %arg5[%c1_35, %c0_36, %c0_37] : memref<2x1x16xf32, #tpu.memory_space<vmem>>, vector<1x1x16xf32>
    %40 = vector.shape_cast %39 : vector<1x1x16xf32> to vector<1x16xf32>
    %41 = vector.shape_cast %38 : vector<1x16xf32> to vector<1x1x16xf32>
    tpu.vector_store %arg5[%c1_35, %c0_36, %c0_37], %41 {strides = array<i32>} : memref<2x1x16xf32, #tpu.memory_space<vmem>>, vector<1x1x16xf32>,
    return
  }
}

</mosaic_0001>

<llo_original>
// kernel: tpu_custom_call.1
$region0: #{tpu_custom_call.1}
  #allocation0 [shape = 'u32[]', space=smem, size = 0x4, offset = 0x4, fixed_abs, tag = 'smem constant byte address 0x4 - core index']
  #allocation1 [shape = 'u32[144,128]{1,0:T(1,128)}', space=vmem, size = 0x12000, scoped, tag = 'internal scratch']
  %s0 = inlined_call_operand.hbm [shape: f32[16,32], index: 0, kind: input, shape index: {}]
  %s1 = inlined_call_operand.hbm [shape: bf16[2,32,32], index: 1, kind: input, shape index: {}]
  %s2 = inlined_call_operand.vmem [shape: f32[2,1,32], index: 2, kind: input, shape index: {}]
  %s3 = inlined_call_operand.vmem [shape: f32[2,1,32], index: 3, kind: input, shape index: {}]
  %s4 = inlined_call_operand.hbm [shape: bf16[32,32], index: 4, kind: output, shape index: {0}]
  %s5 = inlined_call_operand.hbm [shape: f32[2,1,16], index: 5, kind: output, shape index: {1}]
  %s6 = inlined_call_operand.vmem [shape: f32[2,16,1], index: 6, kind: output, shape index: {2}]
  %7 = xla_tuple %s4, %s5, %s6
  %s8 = sld [smem:[#allocation0]]
  $region50: #{tpu_custom_call.1} parent=0
    _
  %s10 = ssub.s32 1, %s8
  %s11 = scalar_select 0, %s10, %s8
  $region1: #{tpu_custom_call.1} parent=0
    #allocation2 [shape = 'u8[8192]{0}', space=vmem, size = 0x2000, scoped, tag = 'input window, operand 0, single buffered']
    #allocation3 [shape = 's32[1]{0}', space=sflag, size = 0x4, scoped, tag = 'scoped memory for tpu_custom_call.1']
    #allocation4 [shape = 's32[1]{0}', space=sflag, size = 0x4, scoped, tag = 'scoped memory for tpu_custom_call.1']
    #allocation5 [shape = 'u8[16384]{0}', space=vmem, size = 0x4000, scoped, tag = 'input window, operand 1, single buffered']
    #allocation6 [shape = 's32[1]{0}', space=sflag, size = 0x4, scoped, tag = 'scoped memory for tpu_custom_call.1']
    #allocation7 [shape = 'u8[8192]{0}', space=vmem, size = 0x2000, scoped, tag = 'output window, operand 0, single buffered']
    #allocation8 [shape = 'u8[1024]{0}', space=vmem, size = 0x400, scoped, tag = 'output window, operand 1, single buffered']
    #allocation9 [shape = 's32[1]{0}', space=sflag, size = 0x4, scoped, tag = 'scoped memory for tpu_custom_call.1']
    %12 = vsyncpa [#allocation3], 0
    %13 = vsyncpa [#allocation6], 0
    %14 = vsyncpa [#allocation4], 0
    %15 = vsyncpa [#allocation9], 0
    // Predicated region
    $region2: #{tpu_custom_call.1} parent=1 // pred_check
      _
    $region3: #{tpu_custom_call.1} parent=1 // pred_check_branch
      %17 = sbr.rel (0) target = $region5
    $region4: #{tpu_custom_call.1} parent=1 // pred_region
      %s19 = ssub.s32 256, 256
      %20 = vsyncadd [#allocation3], %s19
      %s21 = sshll.u32 [#allocation2], 4
      %s22 = int_to_ptr.vmem [resolvable:$true] %s21
      %27 = dma.hbm_to_vmem [thread:$0]  %s0, 256, %s22, [#allocation3], 128, 128, 8
    $region5: #{tpu_custom_call.1} parent=1 // pred_fallthru
      _
    // Predicated region
    $region6: #{tpu_custom_call.1} parent=1 // pred_check
      _
    $region7: #{tpu_custom_call.1} parent=1 // pred_check_branch
      %29 = sbr.rel (0) target = $region9
    $region8: #{tpu_custom_call.1} parent=1 // pred_region
      %s31 = ssub.s32 512, 512
      %32 = vsyncadd [#allocation6], %s31
      %s33 = sshll.u32 [#allocation5], 4
      %s34 = int_to_ptr.vmem [resolvable:$true] %s33
      %39 = dma.hbm_to_vmem [thread:$0]  %s1, 512, %s34, [#allocation6], 64, 64, 4
    $region9: #{tpu_custom_call.1} parent=1 // pred_fallthru
      _
    // Predicated region
    $region10: #{tpu_custom_call.1} parent=1 // pred_check
      _
    $region11: #{tpu_custom_call.1} parent=1 // pred_check_branch
      %41 = sbr.rel (0) target = $region13
    $region12: #{tpu_custom_call.1} parent=1 // pred_region
      _
    $region13: #{tpu_custom_call.1} parent=1 // pred_fallthru
      _
    // Predicated region
    $region14: #{tpu_custom_call.1} parent=1 // pred_check
      _
    $region15: #{tpu_custom_call.1} parent=1 // pred_check_branch
      %43 = sbr.rel (0) target = $region17
    $region16: #{tpu_custom_call.1} parent=1 // pred_region
      _
    $region17: #{tpu_custom_call.1} parent=1 // pred_fallthru
      _
    // Predicated region
    $region18: #{tpu_custom_call.1} parent=1 // pred_check
      _
    $region19: #{tpu_custom_call.1} parent=1 // pred_check_branch
      %45 = sbr.rel (0) target = $region21
    $region20: #{tpu_custom_call.1} parent=1 // pred_region
      %46 = dma.done [#allocation3], 256
    $region21: #{tpu_custom_call.1} parent=1 // pred_fallthru
      _
    // Predicated region
    $region22: #{tpu_custom_call.1} parent=1 // pred_check
      _
    $region23: #{tpu_custom_call.1} parent=1 // pred_check_branch
      %48 = sbr.rel (0) target = $region25
    $region24: #{tpu_custom_call.1} parent=1 // pred_region
      %49 = dma.done [#allocation6], 512
    $region25: #{tpu_custom_call.1} parent=1 // pred_fallthru
      _
    %v51 = vld [vmem:[#allocation2] sm:$0xff]
    %v52 = vld [vmem:[#allocation2 + $0x8] sm:$0xff]
    %v53 = vpack.c.bf16 %v52, %v51
    %v54 = vld [vmem:[#allocation5] sm:$0xf]
    %v55 = vld [vmem:[#allocation5 + $0x4] sm:$0xf]
    %v56 = vld [vmem:[#allocation5 + $0x8] sm:$0xf]
    %v57 = vld [vmem:[#allocation5 + $0xc] sm:$0xf]
    %v62 = vunpack.c.l.b16 %v54
    %v63 = vunpack.c.l.b16 %v55
    %v64 = vunpack.c.l.b16 %v56
    %v65 = vunpack.c.l.b16 %v57
    %v66 = vpack.c.b16 %v63, %v62
    %v67 = vpack.c.b16 %v65, %v64
    %vm70 = vcmask 261120
    %v72 = vsel %vm70, %v53, 0
    %74 = vmatprep.subr.bf16.mxu0 0
    %75 = vmatpush1.bf16.msra.mxu0 %v66
    %76 = vmatprep.subr.bf16.mxu0 0
    %77 = vmatpush1.bf16.msra.mxu0 %v67
    %78 = vmatprep.subr.bf16.mxu0 0
    %79 = vmatpush1.bf16.msra.mxu0 0
    %80 = vmatprep.subr.bf16.mxu0 0
    %81 = vmatpush1.bf16.msra.mxu0 0
    %82 = vmatprep.subr.bf16.mxu0 0
    %83 = vmatpush1.bf16.msra.mxu0 0
    %84 = vmatprep.subr.bf16.mxu0 0
    %85 = vmatpush1.bf16.msra.mxu0 0
    %86 = vmatprep.subr.bf16.mxu0 0
    %87 = vmatpush1.bf16.msra.mxu0 0
    %88 = vmatprep.subr.bf16.mxu0 0
    %89 = vmatpush1.bf16.msra.mxu0 0
    %90 = vmatprep.subr.bf16.mxu0 0
    %91 = vmatpush1.bf16.msra.mxu0 0
    %92 = vmatprep.subr.bf16.mxu0 0
    %93 = vmatpush1.bf16.msra.mxu0 0
    %94 = vmatprep.subr.bf16.mxu0 0
    %95 = vmatpush1.bf16.msra.mxu0 0
    %96 = vmatprep.subr.bf16.mxu0 0
    %97 = vmatpush1.bf16.msra.mxu0 0
    %98 = vmatprep.subr.bf16.mxu0 0
    %99 = vmatpush1.bf16.msra.mxu0 0
    %100 = vmatprep.subr.bf16.mxu0 0
    %101 = vmatpush1.bf16.msra.mxu0 0
    %102 = vmatprep.subr.bf16.mxu0 0
    %103 = vmatpush1.bf16.msra.mxu0 0
    %104 = vmatprep.subr.bf16.mxu0 0
    %105 = vmatpush1.bf16.msra.mxu0 0
    %106 = vmatprep.mubr.bf16.mxu0 0
    %107 = vmatmul.mubr.bf16.gmra.mrb[0].mxu0 %v72
    %v108 = vpop.f32.mrb[0].mxu0
    %v109 = vadd.f32 0.0, %v108
    %v110 = vpop.f32.mrb[0].mxu0
    %v111 = vpop.f32.mrb[0].mxu0
    %v112 = vadd.f32 0.0, %v111
    %v113 = vpop.f32.mrb[0].mxu0
    %114 = vdwg.mxu0
    %v115 = vpack.c.bf16 %v112, %v109
    %v117 = vunpack.c.l.b16 %v115
    %v118 = vunpack.c.h.b16 %v115
    %v119 = vpack.c.b16 %v117, %v117
    %v120 = vpack.c.b16 %v118, %v118
    %vm123 = vcmask 257024
    %124 = vst.msk [vmem:[#allocation7] sm:$0xf] %vm123, %v119
    %125 = vst.msk [vmem:[#allocation7 + $0x4] sm:$0xf] %vm123, %v120
    %v126 = vld [vmem:[%s3] sm:$0x1]
    %v128 = vlaneseq
    %v129 = vshrl.u32 %v128, 7
    %v130 = vsub.s32 0, %v129
    %v131 = vrot.slane %v126, %v130
    %v133 = vmul.f32 %v109, %v131
    %v134 = vmul.f32 %v112, %v131
    %v135 = vsel %vm70, %v133, 0.0
    %136 = vadd.xlane.f32.xlu0 %v135
    %v137 = vpop.xlane.xlu0 %136
    %v138 = vsel %vm70, %v134, 0.0
    %139 = vadd.xlane.f32.xlu0 %v138
    %v140 = vpop.xlane.xlu0 %139
    %vm141 = vcmask 7168
    %142 = vst.msk [vmem:[%s6] sm:$0xff] %vm141, %v137
    %143 = vst.msk [vmem:[%s6 + $0x8] sm:$0xff] %vm141, %v140
    %v144 = vld [vmem:[%s2] sm:$0x1]
    %v146 = vsel %vm70, %v144, 0
    %v149 = vsel %vm70, %v109, 0
    %v152 = vsel %vm70, %v112, 0
    %154 = vmatprep.subr.mxu0 0.0
    %155 = vmatpush1.xpose.msra.mxu0 %v149
    %156 = vmatprep.subr.mxu0 0.0
    %157 = vmatpush1.xpose.msra.mxu0 %v152
    %158 = vmatprep.subr.mxu0 0.0
    %159 = vmatpush1.xpose.msra.mxu0 0.0
    %160 = vmatprep.subr.mxu0 0.0
    %161 = vmatpush1.xpose.msra.mxu0 0.0
    %162 = vmatprep.subr.mxu0 0.0
    %163 = vmatpush1.xpose.msra.mxu0 0.0
    %164 = vmatprep.subr.mxu0 0.0
    %165 = vmatpush1.xpose.msra.mxu0 0.0
    %166 = vmatprep.subr.mxu0 0.0
    %167 = vmatpush1.xpose.msra.mxu0 0.0
    %168 = vmatprep.subr.mxu0 0.0
    %169 = vmatpush1.xpose.msra.mxu0 0.0
    %170 = vmatprep.subr.mxu0 0.0
    %171 = vmatpush1.xpose.msra.mxu0 0.0
    %172 = vmatprep.subr.mxu0 0.0
    %173 = vmatpush1.xpose.msra.mxu0 0.0
    %174 = vmatprep.subr.mxu0 0.0
    %175 = vmatpush1.xpose.msra.mxu0 0.0
    %176 = vmatprep.subr.mxu0 0.0
    %177 = vmatpush1.xpose.msra.mxu0 0.0
    %178 = vmatprep.subr.mxu0 0.0
    %179 = vmatpush1.xpose.msra.mxu0 0.0
    %180 = vmatprep.subr.mxu0 0.0
    %181 = vmatpush1.xpose.msra.mxu0 0.0
    %182 = vmatprep.subr.mxu0 0.0
    %183 = vmatpush1.xpose.msra.mxu0 0.0
    %184 = vmatprep.subr.mxu0 0.0
    %185 = vmatpush1.xpose.msra.mxu0 0.0
    %186 = vmatprep.subr.mxu0 0.0
    %187 = vmatpush1.xpose.msra.mxu0 0.0
    %188 = vmatprep.subr.mxu0 0.0
    %189 = vmatpush1.xpose.msra.mxu0 0.0
    %190 = vmatprep.subr.mxu0 0.0
    %191 = vmatpush1.xpose.msra.mxu0 0.0
    %192 = vmatprep.subr.mxu0 0.0
    %193 = vmatpush1.xpose.msra.mxu0 0.0
    %194 = vmatprep.subr.mxu0 0.0
    %195 = vmatpush1.xpose.msra.mxu0 0.0
    %196 = vmatprep.subr.mxu0 0.0
    %197 = vmatpush1.xpose.msra.mxu0 0.0
    %198 = vmatprep.subr.mxu0 0.0
    %199 = vmatpush1.xpose.msra.mxu0 0.0
    %200 = vmatprep.subr.mxu0 0.0
    %201 = vmatpush1.xpose.msra.mxu0 0.0
    %202 = vmatprep.subr.mxu0 0.0
    %203 = vmatpush1.xpose.msra.mxu0 0.0
    %204 = vmatprep.subr.mxu0 0.0
    %205 = vmatpush1.xpose.msra.mxu0 0.0
    %206 = vmatprep.subr.mxu0 0.0
    %207 = vmatpush1.xpose.msra.mxu0 0.0
    %208 = vmatprep.subr.mxu0 0.0
    %209 = vmatpush1.xpose.msra.mxu0 0.0
    %210 = vmatprep.subr.mxu0 0.0
    %211 = vmatpush1.xpose.msra.mxu0 0.0
    %212 = vmatprep.subr.mxu0 0.0
    %213 = vmatpush1.xpose.msra.mxu0 0.0
    %214 = vmatprep.subr.mxu0 0.0
    %215 = vmatpush1.xpose.msra.mxu0 0.0
    %216 = vmatprep.subr.mxu0 0.0
    %217 = vmatpush1.xpose.msra.mxu0 0.0
    %218 = vmatprep.mubr.f32.mxu0 0.0
    %219 = vmatmul.mubr.f32.gmra.mrb[0].mxu0 %v146
    %v220 = vpop.f32.mrb[0].mxu0
    %v221 = vadd.f32 0.0, %v220
    %v222 = vpop.f32.mrb[0].mxu0
    %223 = vdwg.mxu0
    %vm224 = vcmask 122880
    %225 = vst.msk [vmem:[#allocation8] sm:$0x1] %vm224, %v221
    %s226 = scalar_lea.vmem [#allocation5], 16
    %v227 = vld [vmem:[%s226] sm:$0xf]
    %v228 = vld [vmem:[%s226 + $0x4] sm:$0xf]
    %v229 = vld [vmem:[%s226 + $0x8] sm:$0xf]
    %v230 = vld [vmem:[%s226 + $0xc] sm:$0xf]
    %v235 = vunpack.c.l.b16 %v227
    %v236 = vunpack.c.l.b16 %v228
    %v237 = vunpack.c.l.b16 %v229
    %v238 = vunpack.c.l.b16 %v230
    %v239 = vpack.c.b16 %v236, %v235
    %v240 = vpack.c.b16 %v238, %v237
    %243 = vmatprep.subr.bf16.mxu0 0
    %244 = vmatpush1.bf16.msra.mxu0 %v239
    %245 = vmatprep.subr.bf16.mxu0 0
    %246 = vmatpush1.bf16.msra.mxu0 %v240
    %247 = vmatprep.subr.bf16.mxu0 0
    %248 = vmatpush1.bf16.msra.mxu0 0
    %249 = vmatprep.subr.bf16.mxu0 0
    %250 = vmatpush1.bf16.msra.mxu0 0
    %251 = vmatprep.subr.bf16.mxu0 0
    %252 = vmatpush1.bf16.msra.mxu0 0
    %253 = vmatprep.subr.bf16.mxu0 0
    %254 = vmatpush1.bf16.msra.mxu0 0
    %255 = vmatprep.subr.bf16.mxu0 0
    %256 = vmatpush1.bf16.msra.mxu0 0
    %257 = vmatprep.subr.bf16.mxu0 0
    %258 = vmatpush1.bf16.msra.mxu0 0
    %259 = vmatprep.subr.bf16.mxu0 0
    %260 = vmatpush1.bf16.msra.mxu0 0
    %261 = vmatprep.subr.bf16.mxu0 0
    %262 = vmatpush1.bf16.msra.mxu0 0
    %263 = vmatprep.subr.bf16.mxu0 0
    %264 = vmatpush1.bf16.msra.mxu0 0
    %265 = vmatprep.subr.bf16.mxu0 0
    %266 = vmatpush1.bf16.msra.mxu0 0
    %267 = vmatprep.subr.bf16.mxu0 0
    %268 = vmatpush1.bf16.msra.mxu0 0
    %269 = vmatprep.subr.bf16.mxu0 0
    %270 = vmatpush1.bf16.msra.mxu0 0
    %271 = vmatprep.subr.bf16.mxu0 0
    %272 = vmatpush1.bf16.msra.mxu0 0
    %273 = vmatprep.subr.bf16.mxu0 0
    %274 = vmatpush1.bf16.msra.mxu0 0
    %275 = vmatprep.mubr.bf16.mxu0 0
    %276 = vmatmul.mubr.bf16.gmra.mrb[0].mxu0 %v72
    %v277 = vpop.f32.mrb[0].mxu0
    %v278 = vadd.f32 0.0, %v277
    %v279 = vpop.f32.mrb[0].mxu0
    %v280 = vpop.f32.mrb[0].mxu0
    %v281 = vadd.f32 0.0, %v280
    %v282 = vpop.f32.mrb[0].mxu0
    %283 = vdwg.mxu0
    %v284 = vpack.c.bf16 %v281, %v278
    %v286 = vunpack.c.l.b16 %v284
    %v287 = vunpack.c.h.b16 %v284
    %v288 = vpack.c.b16 %v286, %v286
    %v289 = vpack.c.b16 %v287, %v287
    %292 = vst.msk [vmem:[#allocation7 + $0x8] sm:$0xf] %vm123, %v288
    %293 = vst.msk [vmem:[#allocation7 + $0xc] sm:$0xf] %vm123, %v289
    %s294 = scalar_lea.vmem %s3, 1
    %v295 = vld [vmem:[%s294] sm:$0x1]
    %v297 = vlaneseq
    %v298 = vshrl.u32 %v297, 7
    %v299 = vsub.s32 0, %v298
    %v300 = vrot.slane %v295, %v299
    %v302 = vmul.f32 %v278, %v300
    %v303 = vmul.f32 %v281, %v300
    %v304 = vsel %vm70, %v302, 0.0
    %305 = vadd.xlane.f32.xlu0 %v304
    %v306 = vpop.xlane.xlu0 %305
    %v307 = vsel %vm70, %v303, 0.0
    %308 = vadd.xlane.f32.xlu0 %v307
    %v309 = vpop.xlane.xlu0 %308
    %s310 = scalar_lea.vmem %s6, 16
    %311 = vst.msk [vmem:[%s310] sm:$0xff] %vm141, %v306
    %312 = vst.msk [vmem:[%s310 + $0x8] sm:$0xff] %vm141, %v309
    %s313 = scalar_lea.vmem %s2, 1
    %v314 = vld [vmem:[%s313] sm:$0x1]
    %v316 = vsel %vm70, %v314, 0
    %v319 = vsel %vm70, %v278, 0
    %v322 = vsel %vm70, %v281, 0
    %324 = vmatprep.subr.mxu0 0.0
    %325 = vmatpush1.xpose.msra.mxu0 %v319
    %326 = vmatprep.subr.mxu0 0.0
    %327 = vmatpush1.xpose.msra.mxu0 %v322
    %328 = vmatprep.subr.mxu0 0.0
    %329 = vmatpush1.xpose.msra.mxu0 0.0
    %330 = vmatprep.subr.mxu0 0.0
    %331 = vmatpush1.xpose.msra.mxu0 0.0
    %332 = vmatprep.subr.mxu0 0.0
    %333 = vmatpush1.xpose.msra.mxu0 0.0
    %334 = vmatprep.subr.mxu0 0.0
    %335 = vmatpush1.xpose.msra.mxu0 0.0
    %336 = vmatprep.subr.mxu0 0.0
    %337 = vmatpush1.xpose.msra.mxu0 0.0
    %338 = vmatprep.subr.mxu0 0.0
    %339 = vmatpush1.xpose.msra.mxu0 0.0
    %340 = vmatprep.subr.mxu0 0.0
    %341 = vmatpush1.xpose.msra.mxu0 0.0
    %342 = vmatprep.subr.mxu0 0.0
    %343 = vmatpush1.xpose.msra.mxu0 0.0
    %344 = vmatprep.subr.mxu0 0.0
    %345 = vmatpush1.xpose.msra.mxu0 0.0
    %346 = vmatprep.subr.mxu0 0.0
    %347 = vmatpush1.xpose.msra.mxu0 0.0
    %348 = vmatprep.subr.mxu0 0.0
    %349 = vmatpush1.xpose.msra.mxu0 0.0
    %350 = vmatprep.subr.mxu0 0.0
    %351 = vmatpush1.xpose.msra.mxu0 0.0
    %352 = vmatprep.subr.mxu0 0.0
    %353 = vmatpush1.xpose.msra.mxu0 0.0
    %354 = vmatprep.subr.mxu0 0.0
    %355 = vmatpush1.xpose.msra.mxu0 0.0
    %356 = vmatprep.subr.mxu0 0.0
    %357 = vmatpush1.xpose.msra.mxu0 0.0
    %358 = vmatprep.subr.mxu0 0.0
    %359 = vmatpush1.xpose.msra.mxu0 0.0
    %360 = vmatprep.subr.mxu0 0.0
    %361 = vmatpush1.xpose.msra.mxu0 0.0
    %362 = vmatprep.subr.mxu0 0.0
    %363 = vmatpush1.xpose.msra.mxu0 0.0
    %364 = vmatprep.subr.mxu0 0.0
    %365 = vmatpush1.xpose.msra.mxu0 0.0
    %366 = vmatprep.subr.mxu0 0.0
    %367 = vmatpush1.xpose.msra.mxu0 0.0
    %368 = vmatprep.subr.mxu0 0.0
    %369 = vmatpush1.xpose.msra.mxu0 0.0
    %370 = vmatprep.subr.mxu0 0.0
    %371 = vmatpush1.xpose.msra.mxu0 0.0
    %372 = vmatprep.subr.mxu0 0.0
    %373 = vmatpush1.xpose.msra.mxu0 0.0
    %374 = vmatprep.subr.mxu0 0.0
    %375 = vmatpush1.xpose.msra.mxu0 0.0
    %376 = vmatprep.subr.mxu0 0.0
    %377 = vmatpush1.xpose.msra.mxu0 0.0
    %378 = vmatprep.subr.mxu0 0.0
    %379 = vmatpush1.xpose.msra.mxu0 0.0
    %380 = vmatprep.subr.mxu0 0.0
    %381 = vmatpush1.xpose.msra.mxu0 0.0
    %382 = vmatprep.subr.mxu0 0.0
    %383 = vmatpush1.xpose.msra.mxu0 0.0
    %384 = vmatprep.subr.mxu0 0.0
    %385 = vmatpush1.xpose.msra.mxu0 0.0
    %386 = vmatprep.subr.mxu0 0.0
    %387 = vmatpush1.xpose.msra.mxu0 0.0
    %388 = vmatprep.mubr.f32.mxu0 0.0
    %389 = vmatmul.mubr.f32.gmra.mrb[0].mxu0 %v316
    %v390 = vpop.f32.mrb[0].mxu0
    %v391 = vadd.f32 0.0, %v390
    %v392 = vpop.f32.mrb[0].mxu0
    %393 = vdwg.mxu0
    %s394 = scalar_lea.vmem [#allocation8], 1
    %395 = vst.msk [vmem:[%s394] sm:$0x1] %vm224, %v391
    // Predicated region
    $region26: #{tpu_custom_call.1} parent=1 // pred_check
      _
    $region27: #{tpu_custom_call.1} parent=1 // pred_check_branch
      %397 = sbr.rel (0) target = $region29
    $region28: #{tpu_custom_call.1} parent=1 // pred_region
      %s399 = ssub.s32 256, 256
      %400 = vsyncadd [#allocation4], %s399
      %s401 = sshll.u32 [#allocation7], 4
      %s402 = int_to_ptr.vmem [resolvable:$true] %s401
      %407 = dma.vmem_to_hbm [thread:$0]  %s402, 256, %s4, [#allocation4], 64, 64, 4
    $region29: #{tpu_custom_call.1} parent=1 // pred_fallthru
      _
    // Predicated region
    $region30: #{tpu_custom_call.1} parent=1 // pred_check
      _
    $region31: #{tpu_custom_call.1} parent=1 // pred_check_branch
      %409 = sbr.rel (0) target = $region33
    $region32: #{tpu_custom_call.1} parent=1 // pred_region
      %s411 = ssub.s32 32, 32
      %412 = vsyncadd [#allocation9], %s411
      %s413 = sshll.u32 [#allocation8], 4
      %s414 = int_to_ptr.vmem [resolvable:$true] %s413
      %419 = dma.vmem_to_hbm [thread:$0]  %s414, 32, %s5, [#allocation9], 16, 16, 1
    $region33: #{tpu_custom_call.1} parent=1 // pred_fallthru
      _
    // Predicated region
    $region34: #{tpu_custom_call.1} parent=1 // pred_check
      _
    $region35: #{tpu_custom_call.1} parent=1 // pred_check_branch
      %421 = sbr.rel (0) target = $region37
    $region36: #{tpu_custom_call.1} parent=1 // pred_region
      _
    $region37: #{tpu_custom_call.1} parent=1 // pred_fallthru
      _
    // Predicated region
    $region38: #{tpu_custom_call.1} parent=1 // pred_check
      _
    $region39: #{tpu_custom_call.1} parent=1 // pred_check_branch
      %423 = sbr.rel (0) target = $region41
    $region40: #{tpu_custom_call.1} parent=1 // pred_region
      %424 = dma.done [#allocation4], 256
    $region41: #{tpu_custom_call.1} parent=1 // pred_fallthru
      _
    // Predicated region
    $region42: #{tpu_custom_call.1} parent=1 // pred_check
      _
    $region43: #{tpu_custom_call.1} parent=1 // pred_check_branch
      %426 = sbr.rel (0) target = $region45
    $region44: #{tpu_custom_call.1} parent=1 // pred_region
      %427 = dma.done [#allocation9], 32
    $region45: #{tpu_custom_call.1} parent=1 // pred_fallthru
      _
    // Predicated region
    $region46: #{tpu_custom_call.1} parent=1 // pred_check
      _
    $region47: #{tpu_custom_call.1} parent=1 // pred_check_branch
      %429 = sbr.rel (0) target = $region49
    $region48: #{tpu_custom_call.1} parent=1 // pred_region
      _
    $region49: #{tpu_custom_call.1} parent=1 // pred_fallthru
      _
    %430 = vsyncpa [#allocation3], 1
    %431 = vsyncpa [#allocation6], 1
    %432 = vsyncpa [#allocation4], 1
    %433 = vsyncpa [#allocation9], 1

</llo_original>
